<compile_context>
chip_gen: v5e
topology: v5e:2x2
jax: 0.10.0
libtpu: 0.0.40
codegen_flags: <defaults>
</compile_context>

<pallas_src>
import jax
import jax.numpy as jnp
from jax import lax
from jax.experimental import pallas as pl
from jax.experimental.pallas import tpu as pltpu


# ---------------------------------------------------------------------------
# Phase 1: fused input projection for all timesteps and BOTH directions.
#   gx[r, :] = x[r, :] @ [W_ih_fwd^T | W_ih_bwd^T] + [b_fwd | b_bwd]
# Grid tiles the T*B row dimension.
# ---------------------------------------------------------------------------
def _input_proj_kernel(x_ref, w_ref, b_ref, gx_ref):
    gx_ref[...] = (
        jnp.dot(x_ref[...], w_ref[...], preferred_element_type=jnp.float32)
        + b_ref[...]
    ).astype(gx_ref.dtype)


# ---------------------------------------------------------------------------
# Phase 2: fused fwd+bwd recurrence, grid walks time-chunks.
# ---------------------------------------------------------------------------
def _lstm_recurrent_kernel(gxf_ref, gxb_ref, whh_ref,
                           outf_ref, outb_ref, hn_ref, cn_ref,
                           hf_ref, cf_ref, hb_ref, cb_ref):
    # gxf_ref: (C, B, 4H)  forward-direction gates,  time-chunk s
    # gxb_ref: (C, B, 4H)  backward-direction gates, time-chunk nc-1-s
    # whh_ref: (2, H, 4H)  recurrent weights (gate-reordered, transposed)
    # outf/outb_ref: (C, B, H) output chunks (natural time order)
    # hn/cn_ref: (2, B, H) final states (resident, flushed at grid end)
    # hf/cf/hb/cb_ref: (B, H) f32 carries persisting across grid steps
    s = pl.program_id(0)
    C, B, _ = gxf_ref.shape
    H = outf_ref.shape[-1]

    @pl.when(s == 0)
    def _():
        hf_ref[...] = jnp.zeros_like(hf_ref)
        cf_ref[...] = jnp.zeros_like(cf_ref)
        hb_ref[...] = jnp.zeros_like(hb_ref)
        cb_ref[...] = jnp.zeros_like(cb_ref)

    def cell(gates, c):
        # gate order (i, f, o, g): one sigmoid over 3H lanes + one tanh.
        sig = jax.nn.sigmoid(gates[:, :3 * H])
        g = jnp.tanh(gates[:, 3 * H:])
        i, f, o = sig[:, :H], sig[:, H:2 * H], sig[:, 2 * H:]
        c_new = f * c + i * g
        h_new = o * jnp.tanh(c_new)
        return h_new, c_new

    def step(t, carry):
        h_f, h_b = carry
        tb = C - 1 - t                      # backward walks its chunk reversed
        w_f = whh_ref[0]                    # read from VMEM ref inside the dot
        w_b = whh_ref[1]
        gf = gxf_ref[t].astype(jnp.float32) + jnp.dot(
            h_f.astype(w_f.dtype), w_f, preferred_element_type=jnp.float32)
        gb = gxb_ref[tb].astype(jnp.float32) + jnp.dot(
            h_b.astype(w_b.dtype), w_b, preferred_element_type=jnp.float32)
        h_f, c_f = cell(gf, cf_ref[...])
        h_b, c_b = cell(gb, cb_ref[...])
        cf_ref[...] = c_f                   # c lives in VMEM scratch, not vregs
        cb_ref[...] = c_b
        outf_ref[t] = h_f.astype(outf_ref.dtype)
        outb_ref[tb] = h_b.astype(outb_ref.dtype)
        return (h_f, h_b)

    h_f, h_b = lax.fori_loop(0, C, step, (hf_ref[...], hb_ref[...]), unroll=2)
    hf_ref[...] = h_f
    hb_ref[...] = h_b

    # Resident outputs: the HBM flush happens once at grid end, so the last
    # grid step's values (== the final states) are what lands in HBM.
    hn_ref[0] = h_f.astype(hn_ref.dtype)
    hn_ref[1] = h_b.astype(hn_ref.dtype)
    cn_ref[0] = cf_ref[...].astype(cn_ref.dtype)
    cn_ref[1] = cb_ref[...].astype(cn_ref.dtype)


# ---------------------------------------------------------------------------
# Wrapper
# ---------------------------------------------------------------------------
def _gate_perm(H):
    # PyTorch gate row order (i, f, g, o) -> (i, f, o, g).
    return jnp.concatenate([
        jnp.arange(0, 2 * H),        # i, f
        jnp.arange(3 * H, 4 * H),    # o
        jnp.arange(2 * H, 3 * H),    # g
    ])


def bidir_lstm(x, w_ih, w_hh, b_ih, b_hh, *,
               compute_dtype=jnp.float32, time_chunk=None, row_tile=512):
    """Bidirectional single-layer LSTM matching torch.nn.LSTM(bidirectional=True).

    x: (T, B, In) f32.  w_ih: (2, 4H, In), w_hh: (2, 4H, H),
    b_ih/b_hh: (2, 4H)  (PyTorch layout, gate order i,f,g,o).
    Returns (output (T, B, 2H) f32, (h_n (2, B, H), c_n (2, B, H)) f32).
    """
    T, B, In = x.shape
    H = w_hh.shape[-1]
    G4, G8 = 4 * H, 8 * H

    # ---- wrapper glue: gate reorder, transpose, bias fuse, dtype cast ------
    perm = _gate_perm(H)
    w_ih_r = jnp.take(w_ih, perm, axis=1)                       # (2, 4H, In)
    w_hh_r = jnp.take(w_hh, perm, axis=1)                       # (2, 4H, H)
    b_r = jnp.take(b_ih + b_hh, perm, axis=1)                   # (2, 4H)

    w_ih_cat = jnp.concatenate([w_ih_r[0].T, w_ih_r[1].T],
                               axis=-1).astype(compute_dtype)   # (In, 8H)
    b_cat = jnp.concatenate([b_r[0], b_r[1]]).reshape(1, G8).astype(jnp.float32)
    w_hh_t = jnp.transpose(w_hh_r, (0, 2, 1)).astype(compute_dtype)  # (2,H,4H)
    x2d = x.reshape(T * B, In).astype(compute_dtype)            # (T*B, In)

    # ---- Phase 1: fused input projection, tiled over T*B rows --------------
    rows = T * B
    rt = min(rows, row_tile)
    rows_pad = pl.cdiv(rows, rt) * rt
    if rows_pad != rows:
        x2d = jnp.pad(x2d, ((0, rows_pad - rows), (0, 0)))

    gx = pl.pallas_call(
        _input_proj_kernel,
        out_shape=jax.ShapeDtypeStruct((rows_pad, G8), compute_dtype),
        grid_spec=pltpu.PrefetchScalarGridSpec(
            num_scalar_prefetch=0,
            grid=(rows_pad // rt,),
            in_specs=[
                pl.BlockSpec((rt, In), lambda r: (r, 0)),
                pl.BlockSpec((In, G8), lambda r: (0, 0)),
                pl.BlockSpec((1, G8), lambda r: (0, 0)),
            ],
            out_specs=pl.BlockSpec((rt, G8), lambda r: (r, 0)),
        ),
        compiler_params=pltpu.CompilerParams(
            dimension_semantics=("parallel",)),
    )(x2d, w_ih_cat, b_cat)

    gx = gx[:rows].reshape(T, B, G8)   # fwd gates in [:4H], bwd in [4H:]

    # ---- Phase 2: fused fwd+bwd recurrence streamed over time chunks -------
    if time_chunk is None:
        time_chunk = next(c for c in (16, 8, 4, 2, 1) if T % c == 0)
    assert T % time_chunk == 0, "time_chunk must divide T"
    C = time_chunk
    nc = T // C

    out_f, out_b, h_n, c_n = pl.pallas_call(
        _lstm_recurrent_kernel,
        out_shape=(
            jax.ShapeDtypeStruct((T, B, H), jnp.float32),
            jax.ShapeDtypeStruct((T, B, H), jnp.float32),
            jax.ShapeDtypeStruct((2, B, H), jnp.float32),
            jax.ShapeDtypeStruct((2, B, H), jnp.float32),
        ),
        grid_spec=pltpu.PrefetchScalarGridSpec(
            num_scalar_prefetch=0,
            grid=(nc,),
            in_specs=[
                # forward gates: time chunk s, lane-block 0 (columns [:4H])
                pl.BlockSpec((C, B, G4), lambda s: (s, 0, 0)),
                # backward gates: time chunk nc-1-s, lane-block 1 ([4H:8H])
                pl.BlockSpec((C, B, G4), lambda s: (nc - 1 - s, 0, 1)),
                pl.BlockSpec((2, H, G4), lambda s: (0, 0, 0)),
            ],
            out_specs=[
                pl.BlockSpec((C, B, H), lambda s: (s, 0, 0)),
                pl.BlockSpec((C, B, H), lambda s: (nc - 1 - s, 0, 0)),
                pl.BlockSpec((2, B, H), lambda s: (0, 0, 0)),
                pl.BlockSpec((2, B, H), lambda s: (0, 0, 0)),
            ],
            scratch_shapes=[
                pltpu.VMEM((B, H), jnp.float32),   # h_fwd carry
                pltpu.VMEM((B, H), jnp.float32),   # c_fwd carry
                pltpu.VMEM((B, H), jnp.float32),   # h_bwd carry
                pltpu.VMEM((B, H), jnp.float32),   # c_bwd carry
            ],
        ),
        compiler_params=pltpu.CompilerParams(
            dimension_semantics=("arbitrary",)),   # carries across chunks
    )(gx, gx, w_hh_t)

    # H (32 here / 128 in the real model) would need to be a multiple of 128
    # for a direct lane-dense (T,B,2H) write, and the reversed-chunk streaming
    # of the backward direction needs its own output slab anyway -> keep the
    # cheap wrapper concat.
    output = jnp.concatenate([out_f, out_b], axis=-1)   # (T, B, 2H)
    return output, (h_n, c_n)


# ---------------------------------------------------------------------------
# Pure-JAX reference (matches PyTorch nn.LSTM(bidirectional=True))
# ---------------------------------------------------------------------------
def _reference_lstm(x, w_ih, w_hh, b_ih, b_hh):
    T, B, In = x.shape
    H = w_hh.shape[-1]

    def run_dir(x_seq, d):
        wi, wh, bi, bh = w_ih[d], w_hh[d], b_ih[d], b_hh[d]

        def step(carry, x_t):
            h, c = carry
            gates = x_t @ wi.T + h @ wh.T + bi + bh
            i = jax.nn.sigmoid(gates[:, :H])
            f = jax.nn.sigmoid(gates[:, H:2 * H])
            g = jnp.tanh(gates[:, 2 * H:3 * H])
            o = jax.nn.sigmoid(gates[:, 3 * H:])
            c = f * c + i * g
            h = o * jnp.tanh(c)
            return (h, c), h

        init = (jnp.zeros((B, H), jnp.float32), jnp.zeros((B, H), jnp.float32))
        (h_last, c_last), hs = lax.scan(step, init, x_seq)
        return hs, h_last, c_last

    hs_f, hf, cf = run_dir(x, 0)
    hs_b, hb, cb = run_dir(x[::-1], 1)
    hs_b = hs_b[::-1]
    out = jnp.concatenate([hs_f, hs_b], axis=-1)
    h_n = jnp.stack([hf, hb], axis=0)
    c_n = jnp.stack([cf, cb], axis=0)
    return out, (h_n, c_n)


if __name__ == "__main__":
    T, B, In, H = 8, 2, 16, 32

    key = jax.random.PRNGKey(0)
    k_x, k1, k2, k3, k4 = jax.random.split(key, 5)
    scale = 1.0 / jnp.sqrt(H)

    x = jax.random.normal(k_x, (T, B, In), jnp.float32)
    w_ih = jax.random.uniform(k1, (2, 4 * H, In), jnp.float32, -scale, scale)
    w_hh = jax.random.uniform(k2, (2, 4 * H, H), jnp.float32, -scale, scale)
    b_ih = jax.random.uniform(k3, (2, 4 * H), jnp.float32, -scale, scale)
    b_hh = jax.random.uniform(k4, (2, 4 * H), jnp.float32, -scale, scale)

    ref_out, (ref_h, ref_c) = _reference_lstm(x, w_ih, w_hh, b_ih, b_hh)

    # f32 path (tight check). time_chunk=2 -> 4 grid chunks, exercising the
    # streamed pipeline + cross-chunk carries + reversed backward chunks.
    out, (h_n, c_n) = bidir_lstm(x, w_ih, w_hh, b_ih, b_hh,
                                 compute_dtype=jnp.float32, time_chunk=2)
    jax.block_until_ready(out)
    jax.block_until_ready(h_n)
    jax.block_until_ready(c_n)
    assert out.shape == (T, B, 2 * H)
    assert h_n.shape == (2, B, H) and c_n.shape == (2, B, H)
    assert jnp.allclose(out, ref_out, atol=1e-5, rtol=1e-5)
    assert jnp.allclose(h_n, ref_h, atol=1e-5, rtol=1e-5)
    assert jnp.allclose(c_n, ref_c, atol=1e-5, rtol=1e-5)

    # bf16-storage path (f32 accumulation inside; relaxed tolerance).
    out_bf, (h_bf, c_bf) = bidir_lstm(x, w_ih, w_hh, b_ih, b_hh,
                                      compute_dtype=jnp.bfloat16, time_chunk=4)
    jax.block_until_ready(out_bf)
    assert jnp.allclose(out_bf, ref_out, atol=5e-2, rtol=5e-2)
    assert jnp.allclose(h_bf, ref_h, atol=5e-2, rtol=5e-2)
    assert jnp.allclose(c_bf, ref_c, atol=8e-2, rtol=8e-2)

    print("KERNEL_OK")
</pallas_src>

<mosaic_0001>
module attributes {stable_mosaic.version = 11 : i64} {
  func.func @_input_proj_kernel(%arg0: i32, %arg1: memref<16x16xf32, #tpu.memory_space<vmem>>, %arg2: memref<16x256xf32, #tpu.memory_space<vmem>>, %arg3: memref<1x256xf32, #tpu.memory_space<vmem>>, %arg4: memref<16x256xf32, #tpu.memory_space<vmem>>) attributes {dimension_semantics = [#tpu.dimension_semantics<parallel>], iteration_bounds = array<i64: 1>, scalar_prefetch = 0 : i64, scratch_operands = 0 : i64, tpu.core_type = #tpu.core_type<tc>, window_params = [{transform_indices = @transform_0, window_bounds = array<i64: 16, 16>}, {pipeline_mode = #tpu.pipeline_mode<synchronous>, transform_indices = @transform_1, window_bounds = array<i64: 16, 256>}, {pipeline_mode = #tpu.pipeline_mode<synchronous>, transform_indices = @transform_2, window_bounds = array<i64: 1, 256>}, {transform_indices = @transform_3, window_bounds = array<i64: 16, 256>}]} {
    %c0 = arith.constant 0 : index
    %c0_0 = arith.constant 0 : index
    %0 = vector.load %arg1[%c0, %c0_0] : memref<16x16xf32, #tpu.memory_space<vmem>>, vector<16x16xf32>
    %c0_1 = arith.constant 0 : index
    %c0_2 = arith.constant 0 : index
    %1 = vector.load %arg2[%c0_1, %c0_2] : memref<16x256xf32, #tpu.memory_space<vmem>>, vector<16x256xf32>
    %cst = arith.constant dense<0.000000e+00> : vector<16x256xf32>
    %2 = tpu.matmul %0, %1, %cst {dimension_numbers = #tpu.dot_dimension_numbers<[1], [0], [0], [1], [0, 0, 1, 1], [], []>} : vector<16x16xf32>, vector<16x256xf32>, vector<16x256xf32> -> vector<16x256xf32>
    %c0_3 = arith.constant 0 : index
    %c0_4 = arith.constant 0 : index
    %3 = vector.load %arg3[%c0_3, %c0_4] : memref<1x256xf32, #tpu.memory_space<vmem>>, vector<1x256xf32>
    %4 = vector.broadcast %3 : vector<1x256xf32> to vector<16x256xf32>
    %5 = arith.addf %2, %4 : vector<16x256xf32>
    %c0_5 = arith.constant 0 : index
    %c0_6 = arith.constant 0 : index
    %6 = vector.load %arg4[%c0_5, %c0_6] : memref<16x256xf32, #tpu.memory_space<vmem>>, vector<16x256xf32>
    tpu.vector_store %arg4[%c0_5, %c0_6], %5 {strides = array<i32>} : memref<16x256xf32, #tpu.memory_space<vmem>>, vector<16x256xf32>,
    return
  }
  func.func @transform_0(%arg0: i32) -> (i32, i32) {
    %c0_i32 = arith.constant 0 : i32
    %c0_i32_0 = arith.constant 0 : i32
    return %arg0, %c0_i32 : i32, i32
  }
  func.func @transform_1(%arg0: i32) -> (i32, i32) {
    %c0_i32 = arith.constant 0 : i32
    %c0_i32_0 = arith.constant 0 : i32
    %c0_i32_1 = arith.constant 0 : i32
    return %c0_i32, %c0_i32_0 : i32, i32
  }
  func.func @transform_2(%arg0: i32) -> (i32, i32) {
    %c0_i32 = arith.constant 0 : i32
    %c0_i32_0 = arith.constant 0 : i32
    %c0_i32_1 = arith.constant 0 : i32
    return %c0_i32, %c0_i32_0 : i32, i32
  }
  func.func @transform_3(%arg0: i32) -> (i32, i32) {
    %c0_i32 = arith.constant 0 : i32
    %c0_i32_0 = arith.constant 0 : i32
    return %arg0, %c0_i32 : i32, i32
  }
}

</mosaic_0001>

<llo_original>
// kernel: tpu_custom_call.1
$region0: #{tpu_custom_call.1}
  #allocation0 [shape = 'u32[]', space=smem, size = 0x4, offset = 0x4, fixed_abs, tag = 'smem constant byte address 0x4 - core index']
  #allocation1 [shape = 'u32[72,128]{1,0:T(1,128)}', space=vmem, size = 0x9000, scoped, tag = 'internal scratch']
  %s0 = inlined_call_operand.hbm [shape: f32[16,16], index: 0, kind: input, shape index: {}]
  %s1 = inlined_call_operand.hbm [shape: f32[16,256], index: 1, kind: input, shape index: {}]
  %s2 = inlined_call_operand.hbm [shape: f32[1,256], index: 2, kind: input, shape index: {}]
  %s3 = inlined_call_operand.hbm [shape: f32[16,256], index: 3, kind: output, shape index: {}]
  %s4 = sld [smem:[#allocation0]]
  $region34: #{tpu_custom_call.1} parent=0
    _
  %s6 = ssub.s32 1, %s4
  %s7 = scalar_select 0, %s6, %s4
  $region1: #{tpu_custom_call.1} parent=0
    #allocation2 [shape = 'u8[8192]{0}', space=vmem, size = 0x2000, scoped, tag = 'input window, operand 0, single buffered']
    #allocation3 [shape = 's32[1]{0}', space=sflag, size = 0x4, scoped, tag = 'scoped memory for tpu_custom_call.1']
    #allocation4 [shape = 's32[1]{0}', space=sflag, size = 0x4, scoped, tag = 'scoped memory for tpu_custom_call.1']
    #allocation5 [shape = 'u8[16384]{0}', space=vmem, size = 0x4000, scoped, tag = 'input window, operand 1, single buffered']
    #allocation6 [shape = 's32[1]{0}', space=sflag, size = 0x4, scoped, tag = 'scoped memory for tpu_custom_call.1']
    #allocation7 [shape = 'u8[1024]{0}', space=vmem, size = 0x400, scoped, tag = 'input window, operand 2, single buffered']
    #allocation8 [shape = 'u8[16384]{0}', space=vmem, size = 0x4000, scoped, tag = 'output window, operand 0, single buffered']
    %8 = vsyncpa [#allocation3], 0
    %9 = vsyncpa [#allocation6], 0
    %10 = vsyncpa [#allocation4], 0
    // Predicated region
    $region2: #{tpu_custom_call.1} parent=1 // pred_check
      _
    $region3: #{tpu_custom_call.1} parent=1 // pred_check_branch
      %12 = sbr.rel (0) target = $region5
    $region4: #{tpu_custom_call.1} parent=1 // pred_region
      %14 = vsyncadd [#allocation3], 0
      %s15 = sshll.u32 %s0, 4
      %s16 = int_to_ptr.hbm [resolvable:$true] %s15
      %s17 = sshll.u32 [#allocation2], 4
      %s18 = int_to_ptr.vmem [resolvable:$true] %s17
      %23 = dma.hbm_to_vmem [thread:$0]  %s16, 256, %s18, [#allocation3], 128, 128, 8
    $region5: #{tpu_custom_call.1} parent=1 // pred_fallthru
      _
    // Predicated region
    $region6: #{tpu_custom_call.1} parent=1 // pred_check
      _
    $region7: #{tpu_custom_call.1} parent=1 // pred_check_branch
      %25 = sbr.rel (0) target = $region9
    $region8: #{tpu_custom_call.1} parent=1 // pred_region
      %27 = vsyncadd [#allocation6], 0
      %s28 = sshll.u32 %s1, 4
      %s29 = int_to_ptr.hbm [resolvable:$true] %s28
      %s30 = sshll.u32 [#allocation5], 4
      %s31 = int_to_ptr.vmem [resolvable:$true] %s30
      %36 = dma.hbm_to_vmem [thread:$0]  %s29, 512, %s31, [#allocation6], 256, 256, 16
    $region9: #{tpu_custom_call.1} parent=1 // pred_fallthru
      _
    // Predicated region
    $region10: #{tpu_custom_call.1} parent=1 // pred_check
      _
    $region11: #{tpu_custom_call.1} parent=1 // pred_check_branch
      %38 = sbr.rel (0) target = $region13
    $region12: #{tpu_custom_call.1} parent=1 // pred_region
      %40 = vsyncadd [#allocation6], 0
      %s42 = sshll.u32 %s2, 4
      %s43 = int_to_ptr.hbm [resolvable:$true] %s42
      %s44 = sshll.u32 [#allocation7], 4
      %s45 = int_to_ptr.vmem [resolvable:$true] %s44
      %47 = dma.hbm_to_vmem [thread:$0]  %s43, 32, %s45, [#allocation6]
    $region13: #{tpu_custom_call.1} parent=1 // pred_fallthru
      _
    // Predicated region
    $region14: #{tpu_custom_call.1} parent=1 // pred_check
      _
    $region15: #{tpu_custom_call.1} parent=1 // pred_check_branch
      %49 = sbr.rel (0) target = $region17
    $region16: #{tpu_custom_call.1} parent=1 // pred_region
      %51 = dma.done [#allocation3], 256
    $region17: #{tpu_custom_call.1} parent=1 // pred_fallthru
      _
    // Predicated region
    $region18: #{tpu_custom_call.1} parent=1 // pred_check
      _
    $region19: #{tpu_custom_call.1} parent=1 // pred_check_branch
      %53 = sbr.rel (0) target = $region21
    $region20: #{tpu_custom_call.1} parent=1 // pred_region
      %55 = dma.done [#allocation6], 512
    $region21: #{tpu_custom_call.1} parent=1 // pred_fallthru
      _
    // Predicated region
    $region22: #{tpu_custom_call.1} parent=1 // pred_check
      _
    $region23: #{tpu_custom_call.1} parent=1 // pred_check_branch
      %57 = sbr.rel (0) target = $region25
    $region24: #{tpu_custom_call.1} parent=1 // pred_region
      %59 = dma.done [#allocation6], 32
    $region25: #{tpu_custom_call.1} parent=1 // pred_fallthru
      _
    %v60 = vld [vmem:[#allocation2] sm:$0xff]
    %v61 = vld [vmem:[#allocation2 + $0x8] sm:$0xff]
    %v62 = vld [vmem:[#allocation5] sm:$0xff]
    %v63 = vld [vmem:[#allocation5 + $0x8] sm:$0xff]
    %v64 = vld [vmem:[#allocation5 + $0x10] sm:$0xff]
    %v65 = vld [vmem:[#allocation5 + $0x18] sm:$0xff]
    %v66 = vld [vmem:[#allocation7] sm:$0x3]
    %v68 = vperm.slane %v66, 0
    %v69 = vperm.slane %v66, 1
    %vm72 = vcmask 130048
    %v74 = vsel %vm72, %v60, 0
    %v77 = vsel %vm72, %v61, 0
    %79 = vmatpush.msra.mxu0 0.0
    %80 = vmatpush.msra.mxu0 0.0
    %81 = vmatpush.msra.mxu0 0.0
    %82 = vmatpush.msra.mxu0 0.0
    %83 = vmatpush.msra.mxu0 0.0
    %84 = vmatpush.msra.mxu0 0.0
    %85 = vmatpush.msra.mxu0 0.0
    %86 = vmatpush.msra.mxu0 0.0
    %87 = vmatpush.msra.mxu0 0.0
    %88 = vmatpush.msra.mxu0 0.0
    %89 = vmatpush.msra.mxu0 0.0
    %90 = vmatpush.msra.mxu0 0.0
    %91 = vmatpush.msra.mxu0 0.0
    %92 = vmatpush.msra.mxu0 0.0
    %93 = vmatpush.msra.mxu0 %v64
    %94 = vmatpush.msra.mxu0 %v62
    %95 = vmatmul.f32.gmra.mxu0 %v74
    %v96 = vpop.f32.mrf.mxu0
    %v97 = vadd.f32 %v68, %v96
    %98 = vmatmul.f32.gmra.mxu0 %v77
    %v99 = vpop.f32.mrf.mxu0
    %v100 = vadd.f32 %v68, %v99
    %101 = vdwg.mxu0
    %102 = vmatpush.msra.mxu0 0.0
    %103 = vmatpush.msra.mxu0 0.0
    %104 = vmatpush.msra.mxu0 0.0
    %105 = vmatpush.msra.mxu0 0.0
    %106 = vmatpush.msra.mxu0 0.0
    %107 = vmatpush.msra.mxu0 0.0
    %108 = vmatpush.msra.mxu0 0.0
    %109 = vmatpush.msra.mxu0 0.0
    %110 = vmatpush.msra.mxu0 0.0
    %111 = vmatpush.msra.mxu0 0.0
    %112 = vmatpush.msra.mxu0 0.0
    %113 = vmatpush.msra.mxu0 0.0
    %114 = vmatpush.msra.mxu0 0.0
    %115 = vmatpush.msra.mxu0 0.0
    %116 = vmatpush.msra.mxu0 %v65
    %117 = vmatpush.msra.mxu0 %v63
    %118 = vmatmul.f32.gmra.mxu0 %v74
    %v119 = vpop.f32.mrf.mxu0
    %v120 = vadd.f32 %v69, %v119
    %121 = vmatmul.f32.gmra.mxu0 %v77
    %v122 = vpop.f32.mrf.mxu0
    %v123 = vadd.f32 %v69, %v122
    %124 = vdwg.mxu0
    %125 = vst [vmem:[#allocation8] sm:$0xff] %v97
    %126 = vst [vmem:[#allocation8 + $0x8] sm:$0xff] %v120
    %127 = vst [vmem:[#allocation8 + $0x10] sm:$0xff] %v100
    %128 = vst [vmem:[#allocation8 + $0x18] sm:$0xff] %v123
    // Predicated region
    $region26: #{tpu_custom_call.1} parent=1 // pred_check
      _
    $region27: #{tpu_custom_call.1} parent=1 // pred_check_branch
      %130 = sbr.rel (0) target = $region29
    $region28: #{tpu_custom_call.1} parent=1 // pred_region
      %132 = vsyncadd [#allocation4], 0
      %s133 = sshll.u32 [#allocation8], 4
      %s134 = int_to_ptr.vmem [resolvable:$true] %s133
      %s135 = sshll.u32 %s3, 4
      %s136 = int_to_ptr.hbm [resolvable:$true] %s135
      %141 = dma.vmem_to_hbm [thread:$0]  %s134, 512, %s136, [#allocation4], 256, 256, 16
    $region29: #{tpu_custom_call.1} parent=1 // pred_fallthru
      _
    // Predicated region
    $region30: #{tpu_custom_call.1} parent=1 // pred_check
      _
    $region31: #{tpu_custom_call.1} parent=1 // pred_check_branch
      %143 = sbr.rel (0) target = $region33
    $region32: #{tpu_custom_call.1} parent=1 // pred_region
      %145 = dma.done [#allocation4], 512
    $region33: #{tpu_custom_call.1} parent=1 // pred_fallthru
      _
    %146 = vsyncpa [#allocation3], 1
    %147 = vsyncpa [#allocation6], 1
    %148 = vsyncpa [#allocation4], 1

</llo_original>
